<compile_context>
chip_gen: v7x
topology: tpu7x:2x2x1
jax: 0.10.0
libtpu: 0.0.40
codegen_flags: <defaults>
</compile_context>

<pallas_src>
import functools

import jax
import jax.numpy as jnp
from jax.experimental import pallas as pl
from jax.experimental.pallas import tpu as pltpu


def _round_up(x, m):
    return ((x + m - 1) // m) * m


def _obs_model_kernel(
    x_ref,
    w1_ref, b1_ref,
    w2_ref, b2_ref,
    w3_ref, b3_ref,
    w4_ref, b4_ref,
    w5_ref, b5_ref,
    o_ref,
    *,
    bf16_epilogue,
):
    """Fused 5-layer MLP (4x ReLU) on one tile of rows; all matmuls on the MXU.

    Matmul operands are in the weight (compute) dtype, accumulation in f32.
    Hidden-layer bias+ReLU run in bf16 when bf16_epilogue (v6e/v7x), else f32.
    """
    compute_dtype = w1_ref.dtype
    use_bf16_epi = bf16_epilogue and compute_dtype == jnp.bfloat16

    def hidden(h, w_ref, b_ref):
        acc = jnp.dot(h, w_ref[...], preferred_element_type=jnp.float32)
        if use_bf16_epi:
            y = acc.astype(compute_dtype) + b_ref[...].astype(compute_dtype)
            return jnp.maximum(y, 0.0)
        y = jnp.maximum(acc + b_ref[...], 0.0)
        return y.astype(compute_dtype)

    h = x_ref[...].astype(compute_dtype)   # f32 -> bf16 cast happens per tile here
    h = hidden(h, w1_ref, b1_ref)
    h = hidden(h, w2_ref, b2_ref)
    h = hidden(h, w3_ref, b3_ref)
    h = hidden(h, w4_ref, b4_ref)
    z = jnp.dot(h, w5_ref[...], preferred_element_type=jnp.float32) + b5_ref[...]
    o_ref[...] = z.astype(o_ref.dtype)     # lane-dense (padded-to-128) store


_SINGLE_STEP_ROWS = 512  # below this, one grid step; overhead beats TC split


def _select_tile(n_rows, row_tile):
    """Pick a row tile: single step for tiny problems, otherwise an even number
    of roughly-equal tiles (<= row_tile) so v7x's two TensorCores balance."""
    if n_rows <= _SINGLE_STEP_ROWS:
        return _round_up(max(n_rows, 16), 16)
    pairs = pl.cdiv(n_rows, 2 * row_tile)
    steps = 2 * pairs
    return _round_up(pl.cdiv(n_rows, steps), 16)


def observation_model_forward(state, params, *, row_tile=2048,
                              use_bf16=True, bf16_epilogue=True):
    """state: [bs, k, dim_x] -> [bs, k, dim_z].

    row_tile: max rows per grid step (sweep 1024-4096; keep a multiple of 256
    on v6e/v7x, 128 on v5e).  Must be a multiple of 16.
    bf16_epilogue: run bias+ReLU in bf16 (v6e/v7x); set False on v5e.
    """
    bs, k, dim_x = state.shape
    dim_z = params["w5"].shape[1]
    n_rows = bs * k
    assert row_tile % 16 == 0 and row_tile >= 16, "row_tile must be a multiple of 16"

    compute_dtype = jnp.bfloat16 if use_bf16 else jnp.float32
    out_dtype = state.dtype
    dz_pad = _round_up(dim_z, 128)          # lane-dense output width

    tile = _select_tile(n_rows, row_tile)
    grid = (pl.cdiv(n_rows, tile),)         # partial last block masked by Pallas

    # Leading-dim merge is free; no wrapper-side cast or pad of the input.
    x2d = state.reshape(n_rows, dim_x)

    def const_spec(shape):
        # Constant index map => weights/biases DMA'd to VMEM once, reused
        # across all grid steps.
        return pl.BlockSpec(shape, lambda i: (0, 0))

    in_specs = [pl.BlockSpec((tile, dim_x), lambda i: (i, 0))]
    flat_params = []
    layer_names = (("w1", "b1"), ("w2", "b2"), ("w3", "b3"),
                   ("w4", "b4"), ("w5", "b5"))
    for idx, (wn, bn) in enumerate(layer_names):
        w = params[wn].astype(compute_dtype)
        b = params[bn].reshape(1, -1).astype(jnp.float32)
        if idx == 4 and dz_pad != dim_z:
            # Zero-pad the final layer so the output is lane-dense (128-wide).
            w = jnp.pad(w, ((0, 0), (0, dz_pad - dim_z)))
            b = jnp.pad(b, ((0, 0), (0, dz_pad - dim_z)))
        in_specs += [const_spec(w.shape), const_spec(b.shape)]
        flat_params += [w, b]

    dims = [dim_x, 64, 128, 128, 64, dz_pad]
    total_rows = grid[0] * tile
    flops = 2 * total_rows * sum(dims[i] * dims[i + 1] for i in range(5))
    w_bytes = sum(int(p.size) * p.dtype.itemsize for p in flat_params)
    bytes_accessed = (n_rows * dim_x * x2d.dtype.itemsize
                      + n_rows * dz_pad * jnp.dtype(out_dtype).itemsize
                      + w_bytes)

    kernel = functools.partial(_obs_model_kernel, bf16_epilogue=bf16_epilogue)

    out = pl.pallas_call(
        kernel,
        out_shape=jax.ShapeDtypeStruct((n_rows, dz_pad), out_dtype),
        grid_spec=pltpu.PrefetchScalarGridSpec(
            num_scalar_prefetch=0,
            grid=grid,
            in_specs=in_specs,
            out_specs=pl.BlockSpec((tile, dz_pad), lambda i: (i, 0)),
        ),
        compiler_params=pltpu.CompilerParams(
            dimension_semantics=("parallel",)),
        cost_estimate=pl.CostEstimate(
            flops=flops, transcendentals=0, bytes_accessed=bytes_accessed),
    )(x2d, *flat_params)

    if dz_pad != dim_z:
        out = out[:, :dim_z]
    return out.reshape(bs, k, dim_z)


def init_params(key, dim_x, dim_z, dtype=jnp.float32):
    """Deterministic init mimicking torch.nn.Linear default (U[-1/sqrt(fan_in), +])."""
    dims = [dim_x, 64, 128, 128, 64, dim_z]
    params = {}
    for idx in range(5):
        fan_in, fan_out = dims[idx], dims[idx + 1]
        key, kw, kb = jax.random.split(key, 3)
        bound = 1.0 / (fan_in ** 0.5)
        params[f"w{idx + 1}"] = jax.random.uniform(
            kw, (fan_in, fan_out), dtype, minval=-bound, maxval=bound)
        params[f"b{idx + 1}"] = jax.random.uniform(
            kb, (fan_out,), dtype, minval=-bound, maxval=bound)
    return params


def reference_forward(state, params, use_bf16=True, bf16_epilogue=True):
    """Pure-JAX reference using the same compute recipe as the kernel."""
    bs, k, dim_x = state.shape
    dim_z = params["w5"].shape[1]
    cdt = jnp.bfloat16 if use_bf16 else jnp.float32
    h = state.reshape(bs * k, dim_x).astype(cdt)
    for i in range(1, 5):
        acc = jnp.dot(h, params[f"w{i}"].astype(cdt),
                      preferred_element_type=jnp.float32)
        if use_bf16 and bf16_epilogue:
            h = jnp.maximum(acc.astype(cdt) + params[f"b{i}"].astype(cdt), 0.0)
        else:
            h = jnp.maximum(acc + params[f"b{i}"], 0.0).astype(cdt)
    z = jnp.dot(h, params["w5"].astype(cdt),
                preferred_element_type=jnp.float32) + params["b5"]
    return z.reshape(bs, k, dim_z).astype(state.dtype)


if __name__ == "__main__":
    key = jax.random.PRNGKey(0)
    dim_x, dim_z = 32, 16

    # ---- Case 1: tiny shape from the module spec (single grid step) --------
    bs, k = 2, 8
    key, ks, kp = jax.random.split(key, 3)
    state = jax.random.normal(ks, (bs, k, dim_x), dtype=jnp.float32)
    params = init_params(kp, dim_x, dim_z)

    fwd = jax.jit(functools.partial(observation_model_forward))
    z_pred = fwd(state, params)
    jax.block_until_ready(z_pred)
    assert z_pred.shape == (bs, k, dim_z)
    ref = reference_forward(state, params)
    assert jnp.allclose(z_pred, ref, atol=1e-2, rtol=1e-2), "mismatch (tiny case)"

    # ---- Case 2: ragged rows -> even grid with masked partial last block ---
    bs2, k2 = 3, 250                       # 750 rows -> tile=384, grid=(2,)
    key, ks2, kp2 = jax.random.split(key, 3)
    state2 = jax.random.normal(ks2, (bs2, k2, dim_x), dtype=jnp.float32)
    params2 = init_params(kp2, dim_x, dim_z)

    z_pred2 = fwd(state2, params2)
    jax.block_until_ready(z_pred2)
    assert z_pred2.shape == (bs2, k2, dim_z)
    ref2 = reference_forward(state2, params2)
    assert jnp.allclose(z_pred2, ref2, atol=1e-2, rtol=1e-2), "mismatch (ragged case)"

    # ---- Case 3: exact multi-step grid with a smaller explicit row_tile ----
    bs3, k3 = 4, 512                       # 2048 rows -> tile=512, grid=(4,)
    key, ks3, kp3 = jax.random.split(key, 3)
    state3 = jax.random.normal(ks3, (bs3, k3, dim_x), dtype=jnp.float32)
    params3 = init_params(kp3, dim_x, dim_z)

    fwd3 = jax.jit(functools.partial(observation_model_forward, row_tile=512))
    z_pred3 = fwd3(state3, params3)
    jax.block_until_ready(z_pred3)
    assert z_pred3.shape == (bs3, k3, dim_z)
    ref3 = reference_forward(state3, params3)
    assert jnp.allclose(z_pred3, ref3, atol=1e-2, rtol=1e-2), "mismatch (multi-step case)"

    print("KERNEL_OK")
</pallas_src>

<mosaic_0001>
module attributes {stable_mosaic.version = 11 : i64} {
  func.func @_obs_model_kernel(%arg0: i32, %arg1: memref<16x32xf32, #tpu.memory_space<vmem>>, %arg2: memref<32x64xbf16, #tpu.memory_space<vmem>>, %arg3: memref<1x64xf32, #tpu.memory_space<vmem>>, %arg4: memref<64x128xbf16, #tpu.memory_space<vmem>>, %arg5: memref<1x128xf32, #tpu.memory_space<vmem>>, %arg6: memref<128x128xbf16, #tpu.memory_space<vmem>>, %arg7: memref<1x128xf32, #tpu.memory_space<vmem>>, %arg8: memref<128x64xbf16, #tpu.memory_space<vmem>>, %arg9: memref<1x64xf32, #tpu.memory_space<vmem>>, %arg10: memref<64x128xbf16, #tpu.memory_space<vmem>>, %arg11: memref<1x128xf32, #tpu.memory_space<vmem>>, %arg12: memref<16x128xf32, #tpu.memory_space<vmem>>) attributes {dimension_semantics = [#tpu.dimension_semantics<parallel>], iteration_bounds = array<i64: 1>, scalar_prefetch = 0 : i64, scratch_operands = 0 : i64, tpu.core_type = #tpu.core_type<tc>, window_params = [{transform_indices = @transform_0, window_bounds = array<i64: 16, 32>}, {pipeline_mode = #tpu.pipeline_mode<synchronous>, transform_indices = @transform_1, window_bounds = array<i64: 32, 64>}, {pipeline_mode = #tpu.pipeline_mode<synchronous>, transform_indices = @transform_2, window_bounds = array<i64: 1, 64>}, {pipeline_mode = #tpu.pipeline_mode<synchronous>, transform_indices = @transform_3, window_bounds = array<i64: 64, 128>}, {pipeline_mode = #tpu.pipeline_mode<synchronous>, transform_indices = @transform_4, window_bounds = array<i64: 1, 128>}, {pipeline_mode = #tpu.pipeline_mode<synchronous>, transform_indices = @transform_5, window_bounds = array<i64: 128, 128>}, {pipeline_mode = #tpu.pipeline_mode<synchronous>, transform_indices = @transform_6, window_bounds = array<i64: 1, 128>}, {pipeline_mode = #tpu.pipeline_mode<synchronous>, transform_indices = @transform_7, window_bounds = array<i64: 128, 64>}, {pipeline_mode = #tpu.pipeline_mode<synchronous>, transform_indices = @transform_8, window_bounds = array<i64: 1, 64>}, {pipeline_mode = #tpu.pipeline_mode<synchronous>, transform_indices = @transform_9, window_bounds = array<i64: 64, 128>}, {pipeline_mode = #tpu.pipeline_mode<synchronous>, transform_indices = @transform_10, window_bounds = array<i64: 1, 128>}, {transform_indices = @transform_11, window_bounds = array<i64: 16, 128>}]} {
    %c0 = arith.constant 0 : index
    %c0_0 = arith.constant 0 : index
    %0 = vector.load %arg1[%c0, %c0_0] : memref<16x32xf32, #tpu.memory_space<vmem>>, vector<16x32xf32>
    %1 = arith.truncf %0 : vector<16x32xf32> to vector<16x32xbf16>
    %c0_1 = arith.constant 0 : index
    %c0_2 = arith.constant 0 : index
    %2 = vector.load %arg2[%c0_1, %c0_2] : memref<32x64xbf16, #tpu.memory_space<vmem>>, vector<32x64xbf16>
    %cst = arith.constant dense<0.000000e+00> : vector<16x64xf32>
    %3 = tpu.matmul %1, %2, %cst {dimension_numbers = #tpu.dot_dimension_numbers<[1], [0], [0], [1], [0, 0, 1, 1], [], []>} : vector<16x32xbf16>, vector<32x64xbf16>, vector<16x64xf32> -> vector<16x64xf32>
    %4 = arith.truncf %3 : vector<16x64xf32> to vector<16x64xbf16>
    %c0_3 = arith.constant 0 : index
    %c0_4 = arith.constant 0 : index
    %5 = vector.load %arg3[%c0_3, %c0_4] : memref<1x64xf32, #tpu.memory_space<vmem>>, vector<1x64xf32>
    %6 = arith.truncf %5 : vector<1x64xf32> to vector<1x64xbf16>
    %7 = vector.broadcast %6 : vector<1x64xbf16> to vector<16x64xbf16>
    %8 = arith.addf %4, %7 : vector<16x64xbf16>
    %cst_5 = arith.constant 0.000000e+00 : bf16
    %9 = vector.broadcast %cst_5 : bf16 to vector<16x64xbf16>
    %10 = arith.maximumf %8, %9 : vector<16x64xbf16>
    %c0_6 = arith.constant 0 : index
    %c0_7 = arith.constant 0 : index
    %11 = vector.load %arg4[%c0_6, %c0_7] : memref<64x128xbf16, #tpu.memory_space<vmem>>, vector<64x128xbf16>
    %cst_8 = arith.constant dense<0.000000e+00> : vector<16x128xf32>
    %12 = tpu.matmul %10, %11, %cst_8 {dimension_numbers = #tpu.dot_dimension_numbers<[1], [0], [0], [1], [0, 0, 1, 1], [], []>} : vector<16x64xbf16>, vector<64x128xbf16>, vector<16x128xf32> -> vector<16x128xf32>
    %13 = arith.truncf %12 : vector<16x128xf32> to vector<16x128xbf16>
    %c0_9 = arith.constant 0 : index
    %c0_10 = arith.constant 0 : index
    %14 = vector.load %arg5[%c0_9, %c0_10] : memref<1x128xf32, #tpu.memory_space<vmem>>, vector<1x128xf32>
    %15 = arith.truncf %14 : vector<1x128xf32> to vector<1x128xbf16>
    %16 = vector.broadcast %15 : vector<1x128xbf16> to vector<16x128xbf16>
    %17 = arith.addf %13, %16 : vector<16x128xbf16>
    %cst_11 = arith.constant 0.000000e+00 : bf16
    %18 = vector.broadcast %cst_11 : bf16 to vector<16x128xbf16>
    %19 = arith.maximumf %17, %18 : vector<16x128xbf16>
    %c0_12 = arith.constant 0 : index
    %c0_13 = arith.constant 0 : index
    %20 = vector.load %arg6[%c0_12, %c0_13] : memref<128x128xbf16, #tpu.memory_space<vmem>>, vector<128x128xbf16>
    %cst_14 = arith.constant dense<0.000000e+00> : vector<16x128xf32>
    %21 = tpu.matmul %19, %20, %cst_14 {dimension_numbers = #tpu.dot_dimension_numbers<[1], [0], [0], [1], [0, 0, 1, 1], [], []>} : vector<16x128xbf16>, vector<128x128xbf16>, vector<16x128xf32> -> vector<16x128xf32>
    %22 = arith.truncf %21 : vector<16x128xf32> to vector<16x128xbf16>
    %c0_15 = arith.constant 0 : index
    %c0_16 = arith.constant 0 : index
    %23 = vector.load %arg7[%c0_15, %c0_16] : memref<1x128xf32, #tpu.memory_space<vmem>>, vector<1x128xf32>
    %24 = arith.truncf %23 : vector<1x128xf32> to vector<1x128xbf16>
    %25 = vector.broadcast %24 : vector<1x128xbf16> to vector<16x128xbf16>
    %26 = arith.addf %22, %25 : vector<16x128xbf16>
    %cst_17 = arith.constant 0.000000e+00 : bf16
    %27 = vector.broadcast %cst_17 : bf16 to vector<16x128xbf16>
    %28 = arith.maximumf %26, %27 : vector<16x128xbf16>
    %c0_18 = arith.constant 0 : index
    %c0_19 = arith.constant 0 : index
    %29 = vector.load %arg8[%c0_18, %c0_19] : memref<128x64xbf16, #tpu.memory_space<vmem>>, vector<128x64xbf16>
    %cst_20 = arith.constant dense<0.000000e+00> : vector<16x64xf32>
    %30 = tpu.matmul %28, %29, %cst_20 {dimension_numbers = #tpu.dot_dimension_numbers<[1], [0], [0], [1], [0, 0, 1, 1], [], []>} : vector<16x128xbf16>, vector<128x64xbf16>, vector<16x64xf32> -> vector<16x64xf32>
    %31 = arith.truncf %30 : vector<16x64xf32> to vector<16x64xbf16>
    %c0_21 = arith.constant 0 : index
    %c0_22 = arith.constant 0 : index
    %32 = vector.load %arg9[%c0_21, %c0_22] : memref<1x64xf32, #tpu.memory_space<vmem>>, vector<1x64xf32>
    %33 = arith.truncf %32 : vector<1x64xf32> to vector<1x64xbf16>
    %34 = vector.broadcast %33 : vector<1x64xbf16> to vector<16x64xbf16>
    %35 = arith.addf %31, %34 : vector<16x64xbf16>
    %cst_23 = arith.constant 0.000000e+00 : bf16
    %36 = vector.broadcast %cst_23 : bf16 to vector<16x64xbf16>
    %37 = arith.maximumf %35, %36 : vector<16x64xbf16>
    %c0_24 = arith.constant 0 : index
    %c0_25 = arith.constant 0 : index
    %38 = vector.load %arg10[%c0_24, %c0_25] : memref<64x128xbf16, #tpu.memory_space<vmem>>, vector<64x128xbf16>
    %cst_26 = arith.constant dense<0.000000e+00> : vector<16x128xf32>
    %39 = tpu.matmul %37, %38, %cst_26 {dimension_numbers = #tpu.dot_dimension_numbers<[1], [0], [0], [1], [0, 0, 1, 1], [], []>} : vector<16x64xbf16>, vector<64x128xbf16>, vector<16x128xf32> -> vector<16x128xf32>
    %c0_27 = arith.constant 0 : index
    %c0_28 = arith.constant 0 : index
    %40 = vector.load %arg11[%c0_27, %c0_28] : memref<1x128xf32, #tpu.memory_space<vmem>>, vector<1x128xf32>
    %41 = vector.broadcast %40 : vector<1x128xf32> to vector<16x128xf32>
    %42 = arith.addf %39, %41 : vector<16x128xf32>
    %c0_29 = arith.constant 0 : index
    %c0_30 = arith.constant 0 : index
    %43 = vector.load %arg12[%c0_29, %c0_30] : memref<16x128xf32, #tpu.memory_space<vmem>>, vector<16x128xf32>
    tpu.vector_store %arg12[%c0_29, %c0_30], %42 {strides = array<i32>} : memref<16x128xf32, #tpu.memory_space<vmem>>, vector<16x128xf32>,
    return
  }
  func.func @transform_0(%arg0: i32) -> (i32, i32) {
    %c0_i32 = arith.constant 0 : i32
    %c0_i32_0 = arith.constant 0 : i32
    return %arg0, %c0_i32 : i32, i32
  }
  func.func @transform_1(%arg0: i32) -> (i32, i32) {
    %c0_i32 = arith.constant 0 : i32
    %c0_i32_0 = arith.constant 0 : i32
    %c0_i32_1 = arith.constant 0 : i32
    return %c0_i32, %c0_i32_0 : i32, i32
  }
  func.func @transform_2(%arg0: i32) -> (i32, i32) {
    %c0_i32 = arith.constant 0 : i32
    %c0_i32_0 = arith.constant 0 : i32
    %c0_i32_1 = arith.constant 0 : i32
    return %c0_i32, %c0_i32_0 : i32, i32
  }
  func.func @transform_3(%arg0: i32) -> (i32, i32) {
    %c0_i32 = arith.constant 0 : i32
    %c0_i32_0 = arith.constant 0 : i32
    %c0_i32_1 = arith.constant 0 : i32
    return %c0_i32, %c0_i32_0 : i32, i32
  }
  func.func @transform_4(%arg0: i32) -> (i32, i32) {
    %c0_i32 = arith.constant 0 : i32
    %c0_i32_0 = arith.constant 0 : i32
    %c0_i32_1 = arith.constant 0 : i32
    return %c0_i32, %c0_i32_0 : i32, i32
  }
  func.func @transform_5(%arg0: i32) -> (i32, i32) {
    %c0_i32 = arith.constant 0 : i32
    %c0_i32_0 = arith.constant 0 : i32
    %c0_i32_1 = arith.constant 0 : i32
    return %c0_i32, %c0_i32_0 : i32, i32
  }
  func.func @transform_6(%arg0: i32) -> (i32, i32) {
    %c0_i32 = arith.constant 0 : i32
    %c0_i32_0 = arith.constant 0 : i32
    %c0_i32_1 = arith.constant 0 : i32
    return %c0_i32, %c0_i32_0 : i32, i32
  }
  func.func @transform_7(%arg0: i32) -> (i32, i32) {
    %c0_i32 = arith.constant 0 : i32
    %c0_i32_0 = arith.constant 0 : i32
    %c0_i32_1 = arith.constant 0 : i32
    return %c0_i32, %c0_i32_0 : i32, i32
  }
  func.func @transform_8(%arg0: i32) -> (i32, i32) {
    %c0_i32 = arith.constant 0 : i32
    %c0_i32_0 = arith.constant 0 : i32
    %c0_i32_1 = arith.constant 0 : i32
    return %c0_i32, %c0_i32_0 : i32, i32
  }
  func.func @transform_9(%arg0: i32) -> (i32, i32) {
    %c0_i32 = arith.constant 0 : i32
    %c0_i32_0 = arith.constant 0 : i32
    %c0_i32_1 = arith.constant 0 : i32
    return %c0_i32, %c0_i32_0 : i32, i32
  }
  func.func @transform_10(%arg0: i32) -> (i32, i32) {
    %c0_i32 = arith.constant 0 : i32
    %c0_i32_0 = arith.constant 0 : i32
    %c0_i32_1 = arith.constant 0 : i32
    return %c0_i32, %c0_i32_0 : i32, i32
  }
  func.func @transform_11(%arg0: i32) -> (i32, i32) {
    %c0_i32 = arith.constant 0 : i32
    %c0_i32_0 = arith.constant 0 : i32
    return %arg0, %c0_i32 : i32, i32
  }
}

</mosaic_0001>

<llo_original>
// kernel: observation_model_forward.1
$region0: #{observation_model_forward.1}
  #allocation0 [shape = 'u32[]', space=smem, size = 0x4, offset = 0x4, fixed_abs, tag = 'smem constant byte address 0x4 - core index']
  #allocation1 [shape = 'u32[144,128]{1,0:T(1,128)}', space=vmem, size = 0x12000, scoped, tag = 'internal scratch']
  %s0 = inlined_call_operand.vmem [shape: f32[16,32], index: 0, kind: input, shape index: {}]
  %s1 = inlined_call_operand.vmem [shape: bf16[32,64], index: 1, kind: input, shape index: {}]
  %s2 = inlined_call_operand.vmem [shape: f32[1,64], index: 2, kind: input, shape index: {}]
  %s3 = inlined_call_operand.vmem [shape: bf16[64,128], index: 3, kind: input, shape index: {}]
  %s4 = inlined_call_operand.vmem [shape: f32[1,128], index: 4, kind: input, shape index: {}]
  %s5 = inlined_call_operand.vmem [shape: bf16[128,128], index: 5, kind: input, shape index: {}]
  %s6 = inlined_call_operand.vmem [shape: f32[1,128], index: 6, kind: input, shape index: {}]
  %s7 = inlined_call_operand.vmem [shape: bf16[128,64], index: 7, kind: input, shape index: {}]
  %s8 = inlined_call_operand.vmem [shape: f32[1,64], index: 8, kind: input, shape index: {}]
  %s9 = inlined_call_operand.vmem [shape: bf16[64,128], index: 9, kind: input, shape index: {}]
  %s10 = inlined_call_operand.vmem [shape: f32[1,128], index: 10, kind: input, shape index: {}]
  %s11 = inlined_call_operand.vmem [shape: f32[16,128], index: 11, kind: output, shape index: {}]
  %s12 = sld [smem:[#allocation0]]
  $region54: #{observation_model_forward.1} parent=0
    _
  %s14 = ssub.s32 1, %s12
  %s15 = scalar_select 0, %s14, %s12
  // Predicated region
  $region2: #{observation_model_forward.1} parent=0 // pred_check
    _
  $region3: #{observation_model_forward.1} parent=0 // pred_check_branch
    %17 = sbr.rel (0) target = $region5
  $region4: #{observation_model_forward.1} parent=0 // pred_region
    _
  $region5: #{observation_model_forward.1} parent=0 // pred_fallthru
    _
  // Predicated region
  $region6: #{observation_model_forward.1} parent=0 // pred_check
    _
  $region7: #{observation_model_forward.1} parent=0 // pred_check_branch
    %19 = sbr.rel (0) target = $region9
  $region8: #{observation_model_forward.1} parent=0 // pred_region
    _
  $region9: #{observation_model_forward.1} parent=0 // pred_fallthru
    _
  // Predicated region
  $region10: #{observation_model_forward.1} parent=0 // pred_check
    _
  $region11: #{observation_model_forward.1} parent=0 // pred_check_branch
    %21 = sbr.rel (0) target = $region13
  $region12: #{observation_model_forward.1} parent=0 // pred_region
    _
  $region13: #{observation_model_forward.1} parent=0 // pred_fallthru
    _
  // Predicated region
  $region14: #{observation_model_forward.1} parent=0 // pred_check
    _
  $region15: #{observation_model_forward.1} parent=0 // pred_check_branch
    %23 = sbr.rel (0) target = $region17
  $region16: #{observation_model_forward.1} parent=0 // pred_region
    _
  $region17: #{observation_model_forward.1} parent=0 // pred_fallthru
    _
  // Predicated region
  $region18: #{observation_model_forward.1} parent=0 // pred_check
    _
  $region19: #{observation_model_forward.1} parent=0 // pred_check_branch
    %25 = sbr.rel (0) target = $region21
  $region20: #{observation_model_forward.1} parent=0 // pred_region
    _
  $region21: #{observation_model_forward.1} parent=0 // pred_fallthru
    _
  // Predicated region
  $region22: #{observation_model_forward.1} parent=0 // pred_check
    _
  $region23: #{observation_model_forward.1} parent=0 // pred_check_branch
    %27 = sbr.rel (0) target = $region25
  $region24: #{observation_model_forward.1} parent=0 // pred_region
    _
  $region25: #{observation_model_forward.1} parent=0 // pred_fallthru
    _
  // Predicated region
  $region26: #{observation_model_forward.1} parent=0 // pred_check
    _
  $region27: #{observation_model_forward.1} parent=0 // pred_check_branch
    %29 = sbr.rel (0) target = $region29
  $region28: #{observation_model_forward.1} parent=0 // pred_region
    _
  $region29: #{observation_model_forward.1} parent=0 // pred_fallthru
    _
  // Predicated region
  $region30: #{observation_model_forward.1} parent=0 // pred_check
    _
  $region31: #{observation_model_forward.1} parent=0 // pred_check_branch
    %31 = sbr.rel (0) target = $region33
  $region32: #{observation_model_forward.1} parent=0 // pred_region
    _
  $region33: #{observation_model_forward.1} parent=0 // pred_fallthru
    _
  // Predicated region
  $region34: #{observation_model_forward.1} parent=0 // pred_check
    _
  $region35: #{observation_model_forward.1} parent=0 // pred_check_branch
    %33 = sbr.rel (0) target = $region37
  $region36: #{observation_model_forward.1} parent=0 // pred_region
    _
  $region37: #{observation_model_forward.1} parent=0 // pred_fallthru
    _
  // Predicated region
  $region38: #{observation_model_forward.1} parent=0 // pred_check
    _
  $region39: #{observation_model_forward.1} parent=0 // pred_check_branch
    %35 = sbr.rel (0) target = $region41
  $region40: #{observation_model_forward.1} parent=0 // pred_region
    _
  $region41: #{observation_model_forward.1} parent=0 // pred_fallthru
    _
  // Predicated region
  $region42: #{observation_model_forward.1} parent=0 // pred_check
    _
  $region43: #{observation_model_forward.1} parent=0 // pred_check_branch
    %37 = sbr.rel (0) target = $region45
  $region44: #{observation_model_forward.1} parent=0 // pred_region
    _
  $region45: #{observation_model_forward.1} parent=0 // pred_fallthru
    _
  %v39 = vld [vmem:[%s0] sm:$0xff]
  %v40 = vld [vmem:[%s0 + $0x8] sm:$0xff]
  %v41 = vpack.c.bf16 %v40, %v39
  %v42 = vld [vmem:[%s1] sm:$0xf]
  %v43 = vld [vmem:[%s1 + $0x4] sm:$0xf]
  %v44 = vld [vmem:[%s1 + $0x8] sm:$0xf]
  %v45 = vld [vmem:[%s1 + $0xc] sm:$0xf]
  %v50 = vunpack.c.l.b16 %v42
  %v51 = vunpack.c.l.b16 %v43
  %v52 = vunpack.c.l.b16 %v44
  %v53 = vunpack.c.l.b16 %v45
  %v54 = vpack.c.b16 %v51, %v50
  %v55 = vpack.c.b16 %v53, %v52
  %vm58 = vcmask 261120
  %v60 = vsel %vm58, %v41, 0
  %62 = vmatprep.subr.bf16.mxu0 0
  %63 = vmatpush1.bf16.msra.mxu0 %v54
  %64 = vmatprep.subr.bf16.mxu0 0
  %65 = vmatpush1.bf16.msra.mxu0 %v55
  %66 = vmatprep.subr.bf16.mxu0 0
  %67 = vmatpush1.bf16.msra.mxu0 0
  %68 = vmatprep.subr.bf16.mxu0 0
  %69 = vmatpush1.bf16.msra.mxu0 0
  %70 = vmatprep.subr.bf16.mxu0 0
  %71 = vmatpush1.bf16.msra.mxu0 0
  %72 = vmatprep.subr.bf16.mxu0 0
  %73 = vmatpush1.bf16.msra.mxu0 0
  %74 = vmatprep.subr.bf16.mxu0 0
  %75 = vmatpush1.bf16.msra.mxu0 0
  %76 = vmatprep.subr.bf16.mxu0 0
  %77 = vmatpush1.bf16.msra.mxu0 0
  %78 = vmatprep.subr.bf16.mxu0 0
  %79 = vmatpush1.bf16.msra.mxu0 0
  %80 = vmatprep.subr.bf16.mxu0 0
  %81 = vmatpush1.bf16.msra.mxu0 0
  %82 = vmatprep.subr.bf16.mxu0 0
  %83 = vmatpush1.bf16.msra.mxu0 0
  %84 = vmatprep.subr.bf16.mxu0 0
  %85 = vmatpush1.bf16.msra.mxu0 0
  %86 = vmatprep.subr.bf16.mxu0 0
  %87 = vmatpush1.bf16.msra.mxu0 0
  %88 = vmatprep.subr.bf16.mxu0 0
  %89 = vmatpush1.bf16.msra.mxu0 0
  %90 = vmatprep.subr.bf16.mxu0 0
  %91 = vmatpush1.bf16.msra.mxu0 0
  %92 = vmatprep.subr.bf16.mxu0 0
  %93 = vmatpush1.bf16.msra.mxu0 0
  %94 = vmatprep.mubr.bf16.mxu0 0
  %95 = vmatmul.mubr.bf16.gmra.mrb[0].mxu0 %v60
  %v96 = vpop.f32.mrb[0].mxu0
  %v97 = vadd.f32 0.0, %v96
  %v98 = vpop.f32.mrb[0].mxu0
  %v99 = vpop.f32.mrb[0].mxu0
  %v100 = vadd.f32 0.0, %v99
  %v101 = vpop.f32.mrb[0].mxu0
  %102 = vdwg.mxu0
  %v103 = vpack.c.bf16 %v100, %v97
  %v104 = vld [vmem:[%s2] sm:$0x1]
  %v105 = vpack.c.bf16 %v104, %v104
  %v107 = vpack.i.b16 %v105, %v105
  %v109 = vlaneseq
  %v110 = vshrl.u32 %v109, 7
  %v111 = vsub.s32 0, %v110
  %v112 = vrot.slane %v107, %v111
  %v113 = vadd.bf16 %v103, %v112
  %v114 = vmax.bf16 %v113, 0
  %v115 = vld [vmem:[%s3] sm:$0xf]
  %v116 = vld [vmem:[%s3 + $0x4] sm:$0xf]
  %v117 = vld [vmem:[%s3 + $0x8] sm:$0xf]
  %v118 = vld [vmem:[%s3 + $0xc] sm:$0xf]
  %v119 = vld [vmem:[%s3 + $0x10] sm:$0xf]
  %v120 = vld [vmem:[%s3 + $0x14] sm:$0xf]
  %v121 = vld [vmem:[%s3 + $0x18] sm:$0xf]
  %v122 = vld [vmem:[%s3 + $0x1c] sm:$0xf]
  %v131 = vunpack.c.l.b16 %v115
  %v132 = vunpack.c.l.b16 %v116
  %v133 = vunpack.c.l.b16 %v117
  %v134 = vunpack.c.l.b16 %v118
  %v135 = vunpack.c.l.b16 %v119
  %v136 = vunpack.c.l.b16 %v120
  %v137 = vunpack.c.l.b16 %v121
  %v138 = vunpack.c.l.b16 %v122
  %v139 = vpack.c.b16 %v132, %v131
  %v140 = vpack.c.b16 %v134, %v133
  %v141 = vpack.c.b16 %v136, %v135
  %v142 = vpack.c.b16 %v138, %v137
  %vm147 = vcmask 523264
  %v149 = vsel %vm147, %v114, 0
  %151 = vmatprep.subr.bf16.mxu0 0
  %152 = vmatpush1.bf16.msra.mxu0 %v139
  %153 = vmatprep.subr.bf16.mxu0 0
  %154 = vmatpush1.bf16.msra.mxu0 %v140
  %155 = vmatprep.subr.bf16.mxu0 0
  %156 = vmatpush1.bf16.msra.mxu0 %v141
  %157 = vmatprep.subr.bf16.mxu0 0
  %158 = vmatpush1.bf16.msra.mxu0 %v142
  %159 = vmatprep.subr.bf16.mxu0 0
  %160 = vmatpush1.bf16.msra.mxu0 0
  %161 = vmatprep.subr.bf16.mxu0 0
  %162 = vmatpush1.bf16.msra.mxu0 0
  %163 = vmatprep.subr.bf16.mxu0 0
  %164 = vmatpush1.bf16.msra.mxu0 0
  %165 = vmatprep.subr.bf16.mxu0 0
  %166 = vmatpush1.bf16.msra.mxu0 0
  %167 = vmatprep.subr.bf16.mxu0 0
  %168 = vmatpush1.bf16.msra.mxu0 0
  %169 = vmatprep.subr.bf16.mxu0 0
  %170 = vmatpush1.bf16.msra.mxu0 0
  %171 = vmatprep.subr.bf16.mxu0 0
  %172 = vmatpush1.bf16.msra.mxu0 0
  %173 = vmatprep.subr.bf16.mxu0 0
  %174 = vmatpush1.bf16.msra.mxu0 0
  %175 = vmatprep.subr.bf16.mxu0 0
  %176 = vmatpush1.bf16.msra.mxu0 0
  %177 = vmatprep.subr.bf16.mxu0 0
  %178 = vmatpush1.bf16.msra.mxu0 0
  %179 = vmatprep.subr.bf16.mxu0 0
  %180 = vmatpush1.bf16.msra.mxu0 0
  %181 = vmatprep.subr.bf16.mxu0 0
  %182 = vmatpush1.bf16.msra.mxu0 0
  %183 = vmatprep.mubr.bf16.mxu0 0
  %184 = vmatmul.mubr.bf16.gmra.mrb[0].mxu0 %v149
  %v185 = vpop.f32.mrb[0].mxu0
  %v186 = vadd.f32 0.0, %v185
  %v187 = vpop.f32.mrb[0].mxu0
  %v188 = vpop.f32.mrb[0].mxu0
  %v189 = vadd.f32 0.0, %v188
  %v190 = vpop.f32.mrb[0].mxu0
  %191 = vdwg.mxu0
  %v192 = vpack.c.bf16 %v189, %v186
  %v193 = vld [vmem:[%s4] sm:$0x1]
  %v194 = vpack.c.bf16 %v193, %v193
  %v196 = vpack.i.b16 %v194, %v194
  %v198 = vlaneseq
  %v199 = vshrl.u32 %v198, 7
  %v200 = vsub.s32 0, %v199
  %v201 = vrot.slane %v196, %v200
  %v202 = vadd.bf16 %v192, %v201
  %v203 = vmax.bf16 %v202, 0
  %v204 = vld [vmem:[%s5] sm:$0xf]
  %v205 = vld [vmem:[%s5 + $0x4] sm:$0xf]
  %v206 = vld [vmem:[%s5 + $0x8] sm:$0xf]
  %v207 = vld [vmem:[%s5 + $0xc] sm:$0xf]
  %v208 = vld [vmem:[%s5 + $0x10] sm:$0xf]
  %v209 = vld [vmem:[%s5 + $0x14] sm:$0xf]
  %v210 = vld [vmem:[%s5 + $0x18] sm:$0xf]
  %v211 = vld [vmem:[%s5 + $0x1c] sm:$0xf]
  %v212 = vld [vmem:[%s5 + $0x20] sm:$0xf]
  %v213 = vld [vmem:[%s5 + $0x24] sm:$0xf]
  %v214 = vld [vmem:[%s5 + $0x28] sm:$0xf]
  %v215 = vld [vmem:[%s5 + $0x2c] sm:$0xf]
  %v216 = vld [vmem:[%s5 + $0x30] sm:$0xf]
  %v217 = vld [vmem:[%s5 + $0x34] sm:$0xf]
  %v218 = vld [vmem:[%s5 + $0x38] sm:$0xf]
  %v219 = vld [vmem:[%s5 + $0x3c] sm:$0xf]
  %v236 = vunpack.c.l.b16 %v204
  %v237 = vunpack.c.l.b16 %v205
  %v238 = vunpack.c.l.b16 %v206
  %v239 = vunpack.c.l.b16 %v207
  %v240 = vunpack.c.l.b16 %v208
  %v241 = vunpack.c.l.b16 %v209
  %v242 = vunpack.c.l.b16 %v210
  %v243 = vunpack.c.l.b16 %v211
  %v244 = vunpack.c.l.b16 %v212
  %v245 = vunpack.c.l.b16 %v213
  %v246 = vunpack.c.l.b16 %v214
  %v247 = vunpack.c.l.b16 %v215
  %v248 = vunpack.c.l.b16 %v216
  %v249 = vunpack.c.l.b16 %v217
  %v250 = vunpack.c.l.b16 %v218
  %v251 = vunpack.c.l.b16 %v219
  %v252 = vpack.c.b16 %v237, %v236
  %v253 = vpack.c.b16 %v239, %v238
  %v254 = vpack.c.b16 %v241, %v240
  %v255 = vpack.c.b16 %v243, %v242
  %v256 = vpack.c.b16 %v245, %v244
  %v257 = vpack.c.b16 %v247, %v246
  %v258 = vpack.c.b16 %v249, %v248
  %v259 = vpack.c.b16 %v251, %v250
  %268 = vmatprep.subr.bf16.mxu0 0
  %269 = vmatpush1.bf16.msra.mxu0 %v252
  %270 = vmatprep.subr.bf16.mxu0 0
  %271 = vmatpush1.bf16.msra.mxu0 %v253
  %272 = vmatprep.subr.bf16.mxu0 0
  %273 = vmatpush1.bf16.msra.mxu0 %v254
  %274 = vmatprep.subr.bf16.mxu0 0
  %275 = vmatpush1.bf16.msra.mxu0 %v255
  %276 = vmatprep.subr.bf16.mxu0 0
  %277 = vmatpush1.bf16.msra.mxu0 %v256
  %278 = vmatprep.subr.bf16.mxu0 0
  %279 = vmatpush1.bf16.msra.mxu0 %v257
  %280 = vmatprep.subr.bf16.mxu0 0
  %281 = vmatpush1.bf16.msra.mxu0 %v258
  %282 = vmatprep.subr.bf16.mxu0 0
  %283 = vmatpush1.bf16.msra.mxu0 %v259
  %284 = vmatprep.subr.bf16.mxu0 0
  %285 = vmatpush1.bf16.msra.mxu0 0
  %286 = vmatprep.subr.bf16.mxu0 0
  %287 = vmatpush1.bf16.msra.mxu0 0
  %288 = vmatprep.subr.bf16.mxu0 0
  %289 = vmatpush1.bf16.msra.mxu0 0
  %290 = vmatprep.subr.bf16.mxu0 0
  %291 = vmatpush1.bf16.msra.mxu0 0
  %292 = vmatprep.subr.bf16.mxu0 0
  %293 = vmatpush1.bf16.msra.mxu0 0
  %294 = vmatprep.subr.bf16.mxu0 0
  %295 = vmatpush1.bf16.msra.mxu0 0
  %296 = vmatprep.subr.bf16.mxu0 0
  %297 = vmatpush1.bf16.msra.mxu0 0
  %298 = vmatprep.subr.bf16.mxu0 0
  %299 = vmatpush1.bf16.msra.mxu0 0
  %300 = vmatprep.mubr.bf16.mxu0 0
  %301 = vmatmul.mubr.bf16.gmra.mrb[0].mxu0 %v203
  %v302 = vpop.f32.mrb[0].mxu0
  %v303 = vadd.f32 0.0, %v302
  %v304 = vpop.f32.mrb[0].mxu0
  %v305 = vpop.f32.mrb[0].mxu0
  %v306 = vadd.f32 0.0, %v305
  %v307 = vpop.f32.mrb[0].mxu0
  %308 = vdwg.mxu0
  %v309 = vpack.c.bf16 %v306, %v303
  %v310 = vld [vmem:[%s6] sm:$0x1]
  %v311 = vpack.c.bf16 %v310, %v310
  %v313 = vpack.i.b16 %v311, %v311
  %v315 = vlaneseq
  %v316 = vshrl.u32 %v315, 7
  %v317 = vsub.s32 0, %v316
  %v318 = vrot.slane %v313, %v317
  %v319 = vadd.bf16 %v309, %v318
  %v320 = vmax.bf16 %v319, 0
  %v321 = vld [vmem:[%s7] sm:$0xf]
  %v322 = vld [vmem:[%s7 + $0x4] sm:$0xf]
  %v323 = vld [vmem:[%s7 + $0x8] sm:$0xf]
  %v324 = vld [vmem:[%s7 + $0xc] sm:$0xf]
  %v325 = vld [vmem:[%s7 + $0x10] sm:$0xf]
  %v326 = vld [vmem:[%s7 + $0x14] sm:$0xf]
  %v327 = vld [vmem:[%s7 + $0x18] sm:$0xf]
  %v328 = vld [vmem:[%s7 + $0x1c] sm:$0xf]
  %v329 = vld [vmem:[%s7 + $0x20] sm:$0xf]
  %v330 = vld [vmem:[%s7 + $0x24] sm:$0xf]
  %v331 = vld [vmem:[%s7 + $0x28] sm:$0xf]
  %v332 = vld [vmem:[%s7 + $0x2c] sm:$0xf]
  %v333 = vld [vmem:[%s7 + $0x30] sm:$0xf]
  %v334 = vld [vmem:[%s7 + $0x34] sm:$0xf]
  %v335 = vld [vmem:[%s7 + $0x38] sm:$0xf]
  %v336 = vld [vmem:[%s7 + $0x3c] sm:$0xf]
  %v353 = vunpack.c.l.b16 %v321
  %v354 = vunpack.c.l.b16 %v322
  %v355 = vunpack.c.l.b16 %v323
  %v356 = vunpack.c.l.b16 %v324
  %v357 = vunpack.c.l.b16 %v325
  %v358 = vunpack.c.l.b16 %v326
  %v359 = vunpack.c.l.b16 %v327
  %v360 = vunpack.c.l.b16 %v328
  %v361 = vunpack.c.l.b16 %v329
  %v362 = vunpack.c.l.b16 %v330
  %v363 = vunpack.c.l.b16 %v331
  %v364 = vunpack.c.l.b16 %v332
  %v365 = vunpack.c.l.b16 %v333
  %v366 = vunpack.c.l.b16 %v334
  %v367 = vunpack.c.l.b16 %v335
  %v368 = vunpack.c.l.b16 %v336
  %v369 = vpack.c.b16 %v354, %v353
  %v370 = vpack.c.b16 %v356, %v355
  %v371 = vpack.c.b16 %v358, %v357
  %v372 = vpack.c.b16 %v360, %v359
  %v373 = vpack.c.b16 %v362, %v361
  %v374 = vpack.c.b16 %v364, %v363
  %v375 = vpack.c.b16 %v366, %v365
  %v376 = vpack.c.b16 %v368, %v367
  %385 = vmatprep.subr.bf16.mxu0 0
  %386 = vmatpush1.bf16.msra.mxu0 %v369
  %387 = vmatprep.subr.bf16.mxu0 0
  %388 = vmatpush1.bf16.msra.mxu0 %v370
  %389 = vmatprep.subr.bf16.mxu0 0
  %390 = vmatpush1.bf16.msra.mxu0 %v371
  %391 = vmatprep.subr.bf16.mxu0 0
  %392 = vmatpush1.bf16.msra.mxu0 %v372
  %393 = vmatprep.subr.bf16.mxu0 0
  %394 = vmatpush1.bf16.msra.mxu0 %v373
  %395 = vmatprep.subr.bf16.mxu0 0
  %396 = vmatpush1.bf16.msra.mxu0 %v374
  %397 = vmatprep.subr.bf16.mxu0 0
  %398 = vmatpush1.bf16.msra.mxu0 %v375
  %399 = vmatprep.subr.bf16.mxu0 0
  %400 = vmatpush1.bf16.msra.mxu0 %v376
  %401 = vmatprep.subr.bf16.mxu0 0
  %402 = vmatpush1.bf16.msra.mxu0 0
  %403 = vmatprep.subr.bf16.mxu0 0
  %404 = vmatpush1.bf16.msra.mxu0 0
  %405 = vmatprep.subr.bf16.mxu0 0
  %406 = vmatpush1.bf16.msra.mxu0 0
  %407 = vmatprep.subr.bf16.mxu0 0
  %408 = vmatpush1.bf16.msra.mxu0 0
  %409 = vmatprep.subr.bf16.mxu0 0
  %410 = vmatpush1.bf16.msra.mxu0 0
  %411 = vmatprep.subr.bf16.mxu0 0
  %412 = vmatpush1.bf16.msra.mxu0 0
  %413 = vmatprep.subr.bf16.mxu0 0
  %414 = vmatpush1.bf16.msra.mxu0 0
  %415 = vmatprep.subr.bf16.mxu0 0
  %416 = vmatpush1.bf16.msra.mxu0 0
  %417 = vmatprep.mubr.bf16.mxu0 0
  %418 = vmatmul.mubr.bf16.gmra.mrb[0].mxu0 %v320
  %v419 = vpop.f32.mrb[0].mxu0
  %v420 = vadd.f32 0.0, %v419
  %v421 = vpop.f32.mrb[0].mxu0
  %v422 = vpop.f32.mrb[0].mxu0
  %v423 = vadd.f32 0.0, %v422
  %v424 = vpop.f32.mrb[0].mxu0
  %425 = vdwg.mxu0
  %v426 = vpack.c.bf16 %v423, %v420
  %v427 = vld [vmem:[%s8] sm:$0x1]
  %v428 = vpack.c.bf16 %v427, %v427
  %v430 = vpack.i.b16 %v428, %v428
  %v432 = vlaneseq
  %v433 = vshrl.u32 %v432, 7
  %v434 = vsub.s32 0, %v433
  %v435 = vrot.slane %v430, %v434
  %v436 = vadd.bf16 %v426, %v435
  %v437 = vmax.bf16 %v436, 0
  %v438 = vld [vmem:[%s9] sm:$0xf]
  %v439 = vld [vmem:[%s9 + $0x4] sm:$0xf]
  %v440 = vld [vmem:[%s9 + $0x8] sm:$0xf]
  %v441 = vld [vmem:[%s9 + $0xc] sm:$0xf]
  %v442 = vld [vmem:[%s9 + $0x10] sm:$0xf]
  %v443 = vld [vmem:[%s9 + $0x14] sm:$0xf]
  %v444 = vld [vmem:[%s9 + $0x18] sm:$0xf]
  %v445 = vld [vmem:[%s9 + $0x1c] sm:$0xf]
  %v446 = vld [vmem:[%s10] sm:$0x1]
  %v448 = vlaneseq
  %v449 = vshrl.u32 %v448, 7
  %v450 = vsub.s32 0, %v449
  %v451 = vrot.slane %v446, %v450
  %v461 = vunpack.c.l.b16 %v438
  %v462 = vunpack.c.l.b16 %v439
  %v463 = vunpack.c.l.b16 %v440
  %v464 = vunpack.c.l.b16 %v441
  %v465 = vunpack.c.l.b16 %v442
  %v466 = vunpack.c.l.b16 %v443
  %v467 = vunpack.c.l.b16 %v444
  %v468 = vunpack.c.l.b16 %v445
  %v469 = vpack.c.b16 %v462, %v461
  %v470 = vpack.c.b16 %v464, %v463
  %v471 = vpack.c.b16 %v466, %v465
  %v472 = vpack.c.b16 %v468, %v467
  %v478 = vsel %vm147, %v437, 0
  %480 = vmatprep.subr.bf16.mxu0 0
  %481 = vmatpush1.bf16.msra.mxu0 %v469
  %482 = vmatprep.subr.bf16.mxu0 0
  %483 = vmatpush1.bf16.msra.mxu0 %v470
  %484 = vmatprep.subr.bf16.mxu0 0
  %485 = vmatpush1.bf16.msra.mxu0 %v471
  %486 = vmatprep.subr.bf16.mxu0 0
  %487 = vmatpush1.bf16.msra.mxu0 %v472
  %488 = vmatprep.subr.bf16.mxu0 0
  %489 = vmatpush1.bf16.msra.mxu0 0
  %490 = vmatprep.subr.bf16.mxu0 0
  %491 = vmatpush1.bf16.msra.mxu0 0
  %492 = vmatprep.subr.bf16.mxu0 0
  %493 = vmatpush1.bf16.msra.mxu0 0
  %494 = vmatprep.subr.bf16.mxu0 0
  %495 = vmatpush1.bf16.msra.mxu0 0
  %496 = vmatprep.subr.bf16.mxu0 0
  %497 = vmatpush1.bf16.msra.mxu0 0
  %498 = vmatprep.subr.bf16.mxu0 0
  %499 = vmatpush1.bf16.msra.mxu0 0
  %500 = vmatprep.subr.bf16.mxu0 0
  %501 = vmatpush1.bf16.msra.mxu0 0
  %502 = vmatprep.subr.bf16.mxu0 0
  %503 = vmatpush1.bf16.msra.mxu0 0
  %504 = vmatprep.subr.bf16.mxu0 0
  %505 = vmatpush1.bf16.msra.mxu0 0
  %506 = vmatprep.subr.bf16.mxu0 0
  %507 = vmatpush1.bf16.msra.mxu0 0
  %508 = vmatprep.subr.bf16.mxu0 0
  %509 = vmatpush1.bf16.msra.mxu0 0
  %510 = vmatprep.subr.bf16.mxu0 0
  %511 = vmatpush1.bf16.msra.mxu0 0
  %512 = vmatprep.mubr.bf16.mxu0 0
  %513 = vmatmul.mubr.bf16.gmra.mrb[0].mxu0 %v478
  %v514 = vpop.f32.mrb[0].mxu0
  %v515 = vadd.f32 %v451, %v514
  %v516 = vpop.f32.mrb[0].mxu0
  %v517 = vpop.f32.mrb[0].mxu0
  %v518 = vadd.f32 %v451, %v517
  %v519 = vpop.f32.mrb[0].mxu0
  %520 = vdwg.mxu0
  %521 = vst [vmem:[%s11] sm:$0xff] %v515
  %522 = vst [vmem:[%s11 + $0x8] sm:$0xff] %v518
  // Predicated region
  $region46: #{observation_model_forward.1} parent=0 // pred_check
    _
  $region47: #{observation_model_forward.1} parent=0 // pred_check_branch
    %524 = sbr.rel (0) target = $region49
  $region48: #{observation_model_forward.1} parent=0 // pred_region
    _
  $region49: #{observation_model_forward.1} parent=0 // pred_fallthru
    _
  // Predicated region
  $region50: #{observation_model_forward.1} parent=0 // pred_check
    _
  $region51: #{observation_model_forward.1} parent=0 // pred_check_branch
    %526 = sbr.rel (0) target = $region53
  $region52: #{observation_model_forward.1} parent=0 // pred_region
    _
  $region53: #{observation_model_forward.1} parent=0 // pred_fallthru
    _

</llo_original>
